<compile_context>
chip_gen: v7x
topology: tpu7x:2x2x1
jax: 0.10.0
libtpu: 0.0.40
codegen_flags: <defaults>
</compile_context>

<pallas_src>
import functools

import jax
import jax.numpy as jnp
from jax.experimental import pallas as pl
from jax.experimental.pallas import tpu as pltpu


def _round_up(x, m):
    return (x + m - 1) // m * m


# --------------------------------------------------------------------------- #
# Kernels
# --------------------------------------------------------------------------- #

def _embed_kernel(x_ref, w0_ref, b0_ref, h_ref):
    # node embedding: x @ W0^T + b0 (weights pre-transposed & lane-padded)
    h_ref[...] = (jnp.dot(x_ref[...], w0_ref[...],
                          preferred_element_type=jnp.float32) + b0_ref[...])


def _gin_mlp_kernel(am_ref, h_ref, ea_ref,
                    we_ref, be_ref, w1_ref, b1_ref, w2_ref, b2_ref,
                    h2_ref, psum_ref, psumsq_ref, *, tile_n, n_real):
    f32 = jnp.float32
    be = be_ref[...]

    # Edge embedding for the real edges: ea @ We^T + be  (tiny [E, Fp] matmul;
    # recomputed per node tile so the grid axis stays "parallel"/megacore-safe).
    edge_emb = jnp.dot(ea_ref[...], we_ref[...], preferred_element_type=f32) + be

    # Fused GIN aggregation: one long-K matmul [A | M] @ [h ; edge_emb],
    # bf16 operands on the MXU with f32 accumulation.
    stacked = jnp.concatenate([h_ref[...], edge_emb], axis=0).astype(jnp.bfloat16)
    aggr = jnp.dot(am_ref[...], stacked, preferred_element_type=f32)
    # Self-loop message: h[i] is already counted in A; its edge embedding is
    # edge_embedding(zeros) = bias, added once per node.
    aggr = aggr + be

    # GIN update mlp: Linear(emb, 2emb) -> ReLU -> Linear(2emb, emb)
    h1 = jnp.maximum(
        jnp.dot(aggr, w1_ref[...], preferred_element_type=f32) + b1_ref[...], 0.0)
    h2 = jnp.dot(h1, w2_ref[...], preferred_element_type=f32) + b2_ref[...]
    h2_ref[...] = h2

    # Single-pass per-tile BatchNorm partial statistics (sum, sum of squares),
    # masking zero-padded node rows so they never pollute the batch stats.
    row = (pl.program_id(0) * tile_n
           + jax.lax.broadcasted_iota(jnp.int32, (tile_n, 1), 0))
    h2m = jnp.where(row < n_real, h2, 0.0)
    s = jnp.sum(h2m, axis=0, keepdims=True)           # [1, Fp]
    ss = jnp.sum(h2m * h2m, axis=0, keepdims=True)    # [1, Fp]
    rows8 = jax.lax.broadcasted_iota(jnp.int32, (8, 1), 0)
    psum_ref[...] = jnp.where(rows8 == 0, s, 0.0)     # row 0 = sum, rest 0
    psumsq_ref[...] = jnp.where(rows8 == 0, ss, 0.0)  # row 0 = sumsq, rest 0


def _bn_kernel(h2_ref, psum_ref, psumsq_ref, gamma_ref, beta_ref, out_ref,
               *, n_real, apply_relu):
    # Reduce the per-tile partial stats (zero rows are free), then normalize.
    inv_n = 1.0 / float(n_real)
    s = jnp.sum(psum_ref[...], axis=0, keepdims=True)
    ss = jnp.sum(psumsq_ref[...], axis=0, keepdims=True)
    mean = s * inv_n
    var = jnp.maximum(ss * inv_n - mean * mean, 0.0)   # biased var, single pass
    inv_std = jax.lax.rsqrt(var + 1e-5)
    y = (h2_ref[...] - mean) * inv_std * gamma_ref[...] + beta_ref[...]
    if apply_relu:                                     # dropout(p=0) == identity
        y = jnp.maximum(y, 0.0)
    out_ref[...] = y


# --------------------------------------------------------------------------- #
# Graph operator construction (done ONCE per graph, outside the hot path)
# --------------------------------------------------------------------------- #

def build_graph_operators(edge_index, num_nodes, tile_n):
    """Fused dense aggregation operator [A | M] in bf16 (exact for counts <= 256).

    A: [n_pad, n_pad] adjacency counts (dst x src) including self loops.
    M: [n_pad, E]     one-hot dst per original (non-self-loop) edge.
    Padded node rows/cols are zero, so they never contribute to aggregation.
    """
    n_pad = _round_up(num_nodes, max(tile_n, 8))
    E = edge_index.shape[1]
    src, dst = edge_index[0], edge_index[1]
    self_idx = jnp.arange(num_nodes, dtype=edge_index.dtype)
    A = jnp.zeros((n_pad, n_pad), jnp.float32).at[dst, src].add(1.0)
    A = A.at[self_idx, self_idx].add(1.0)
    M = jnp.zeros((n_pad, E), jnp.float32).at[dst, jnp.arange(E)].add(1.0)
    return jnp.concatenate([A, M], axis=1).astype(jnp.bfloat16)


# --------------------------------------------------------------------------- #
# Forward pass
# --------------------------------------------------------------------------- #

def gnn_forward(x, edge_attr, am, params, num_layer, *, emb_dim, tile_n):
    n_real, node_feat = x.shape
    n_pad = am.shape[0]
    E, ef = edge_attr.shape
    assert am.shape[1] == n_pad + E and n_pad % tile_n == 0
    num_tiles = n_pad // tile_n
    fp = params["w0t"].shape[1]       # emb_dim lane-padded to 128
    f2p = params["w1t"].shape[2]      # 2*emb_dim lane-padded to 128

    x_pad = jnp.zeros((n_pad, node_feat), jnp.float32).at[:n_real].set(
        x.astype(jnp.float32))
    ea = edge_attr.astype(jnp.float32)

    parallel = pltpu.CompilerParams(dimension_semantics=("parallel",))

    # ---- node embedding -------------------------------------------------- #
    h = pl.pallas_call(
        _embed_kernel,
        out_shape=jax.ShapeDtypeStruct((n_pad, fp), jnp.float32),
        grid_spec=pltpu.PrefetchScalarGridSpec(
            num_scalar_prefetch=0, grid=(num_tiles,),
            in_specs=[pl.BlockSpec((tile_n, node_feat), lambda i: (i, 0)),
                      pl.BlockSpec((node_feat, fp), lambda i: (0, 0)),
                      pl.BlockSpec((1, fp), lambda i: (0, 0))],
            out_specs=pl.BlockSpec((tile_n, fp), lambda i: (i, 0))),
        compiler_params=parallel,
    )(x_pad, params["w0t"], params["b0"])

    # ---- GIN layers ------------------------------------------------------ #
    for l in range(num_layer):
        gin = functools.partial(_gin_mlp_kernel, tile_n=tile_n, n_real=n_real)
        h2, psum, psumsq = pl.pallas_call(
            gin,
            out_shape=(jax.ShapeDtypeStruct((n_pad, fp), jnp.float32),
                       jax.ShapeDtypeStruct((num_tiles * 8, fp), jnp.float32),
                       jax.ShapeDtypeStruct((num_tiles * 8, fp), jnp.float32)),
            grid_spec=pltpu.PrefetchScalarGridSpec(
                num_scalar_prefetch=0, grid=(num_tiles,),
                in_specs=[
                    pl.BlockSpec((tile_n, n_pad + E), lambda i: (i, 0)),  # [A|M] tile (bf16)
                    pl.BlockSpec((n_pad, fp), lambda i: (0, 0)),          # full h, resident
                    pl.BlockSpec((E, ef), lambda i: (0, 0)),              # edge attrs, resident
                    pl.BlockSpec((ef, fp), lambda i: (0, 0)),             # We^T
                    pl.BlockSpec((1, fp), lambda i: (0, 0)),              # be
                    pl.BlockSpec((fp, f2p), lambda i: (0, 0)),            # W1^T
                    pl.BlockSpec((1, f2p), lambda i: (0, 0)),             # b1
                    pl.BlockSpec((f2p, fp), lambda i: (0, 0)),            # W2^T
                    pl.BlockSpec((1, fp), lambda i: (0, 0)),              # b2
                ],
                out_specs=(pl.BlockSpec((tile_n, fp), lambda i: (i, 0)),
                           pl.BlockSpec((8, fp), lambda i: (i, 0)),
                           pl.BlockSpec((8, fp), lambda i: (i, 0)))),
            compiler_params=pltpu.CompilerParams(
                dimension_semantics=("parallel",),
                vmem_limit_bytes=64 * 1024 * 1024),
        )(am, h, ea, params["wet"][l], params["be"][l],
          params["w1t"][l], params["b1"][l], params["w2t"][l], params["b2"][l])

        bn = functools.partial(_bn_kernel, n_real=n_real,
                               apply_relu=(l != num_layer - 1))
        h = pl.pallas_call(
            bn,
            out_shape=jax.ShapeDtypeStruct((n_pad, fp), jnp.float32),
            grid_spec=pltpu.PrefetchScalarGridSpec(
                num_scalar_prefetch=0, grid=(num_tiles,),
                in_specs=[
                    pl.BlockSpec((tile_n, fp), lambda i: (i, 0)),
                    pl.BlockSpec((num_tiles * 8, fp), lambda i: (0, 0)),
                    pl.BlockSpec((num_tiles * 8, fp), lambda i: (0, 0)),
                    pl.BlockSpec((1, fp), lambda i: (0, 0)),
                    pl.BlockSpec((1, fp), lambda i: (0, 0)),
                ],
                out_specs=pl.BlockSpec((tile_n, fp), lambda i: (i, 0))),
            compiler_params=parallel,
        )(h2, psum, psumsq, params["gamma"][l], params["beta"][l])

    # JK == 'last'; strip node and lane padding.
    return h[:n_real, :emb_dim]


# --------------------------------------------------------------------------- #
# Parameters (PyTorch Linear layout, pre-transposed) + lane-padded copies
# --------------------------------------------------------------------------- #

def init_params(key, num_layer, emb_dim, node_feat_dim, edge_feat_dim):
    fp = _round_up(emb_dim, 128)
    f2p = _round_up(2 * emb_dim, 128)
    ks = jax.random.split(key, 8)

    def u(k, shape, scale=0.2):
        return jax.random.uniform(k, shape, jnp.float32, -scale, scale)

    raw = dict(
        w0t=u(ks[0], (node_feat_dim, emb_dim)),             # x_embedding0.weight^T
        b0=u(ks[1], (1, emb_dim)),
        wet=u(ks[2], (num_layer, edge_feat_dim, emb_dim)),  # edge_embedding.weight^T
        be=u(ks[3], (num_layer, 1, emb_dim)),
        w1t=u(ks[4], (num_layer, emb_dim, 2 * emb_dim)),    # mlp[0].weight^T
        b1=u(ks[5], (num_layer, 1, 2 * emb_dim)),
        w2t=u(ks[6], (num_layer, 2 * emb_dim, emb_dim)),    # mlp[2].weight^T
        b2=u(ks[7], (num_layer, 1, emb_dim)),
        gamma=jnp.ones((num_layer, 1, emb_dim), jnp.float32),
        beta=jnp.zeros((num_layer, 1, emb_dim), jnp.float32),
    )

    def pad_last2(a, rows, cols):
        out = jnp.zeros(a.shape[:-2] + (rows, cols), jnp.float32)
        return out.at[..., :a.shape[-2], :a.shape[-1]].set(a)

    padded = dict(
        w0t=pad_last2(raw["w0t"], node_feat_dim, fp),
        b0=pad_last2(raw["b0"], 1, fp),
        wet=pad_last2(raw["wet"], edge_feat_dim, fp),
        be=pad_last2(raw["be"], 1, fp),
        w1t=pad_last2(raw["w1t"], fp, f2p),
        b1=pad_last2(raw["b1"], 1, f2p),
        w2t=pad_last2(raw["w2t"], f2p, fp),
        b2=pad_last2(raw["b2"], 1, fp),
        gamma=pad_last2(raw["gamma"], 1, fp),
        beta=pad_last2(raw["beta"], 1, fp),
    )
    return raw, padded


# --------------------------------------------------------------------------- #
# Pure-JAX reference (faithful to the PyTorch module, f32 throughout)
# --------------------------------------------------------------------------- #

def gnn_reference(x, edge_index, edge_attr, params, num_layer):
    N = x.shape[0]
    self_idx = jnp.arange(N, dtype=edge_index.dtype)
    src = jnp.concatenate([edge_index[0], self_idx])
    dst = jnp.concatenate([edge_index[1], self_idx])
    ea = jnp.concatenate(
        [edge_attr.astype(jnp.float32),
         jnp.zeros((N, edge_attr.shape[1]), jnp.float32)], 0)

    h = x.astype(jnp.float32) @ params["w0t"] + params["b0"]
    for l in range(num_layer):
        ee = ea @ params["wet"][l] + params["be"][l]
        msg = h[src] + ee
        aggr = jnp.zeros_like(h).at[dst].add(msg)
        h1 = jax.nn.relu(aggr @ params["w1t"][l] + params["b1"][l])
        h2 = h1 @ params["w2t"][l] + params["b2"][l]
        mean = h2.mean(0, keepdims=True)
        var = ((h2 - mean) ** 2).mean(0, keepdims=True)
        hbn = (h2 - mean) / jnp.sqrt(var + 1e-5) * params["gamma"][l] + params["beta"][l]
        h = hbn if l == num_layer - 1 else jax.nn.relu(hbn)
    return h


if __name__ == "__main__":
    num_layer = 2
    emb_dim = 32
    node_feat_dim = 8
    edge_feat_dim = 4
    N, E = 16, 24
    tile_n = 8                      # 2 node tiles -> exercises the parallel grid

    key = jax.random.PRNGKey(0)
    k_x, k_ei, k_ea, k_p = jax.random.split(key, 4)

    x = jax.random.normal(k_x, (N, node_feat_dim), jnp.float32)
    edge_index = jax.random.randint(k_ei, (2, E), 0, N, jnp.int32)
    edge_attr = jax.random.normal(k_ea, (E, edge_feat_dim), jnp.float32)
    raw_params, padded_params = init_params(
        k_p, num_layer, emb_dim, node_feat_dim, edge_feat_dim)

    # Built once per graph, reused across forward passes.
    am = build_graph_operators(edge_index, N, tile_n)

    out = gnn_forward(x, edge_attr, am, padded_params, num_layer,
                      emb_dim=emb_dim, tile_n=tile_n)
    out = jax.block_until_ready(out)

    ref = gnn_reference(x, edge_index, edge_attr, raw_params, num_layer)
    assert out.shape == (N, emb_dim)
    # bf16 is used only for the aggregation-matmul operands (f32 accumulation),
    # so a 5e-2 tolerance vs the pure-f32 reference is comfortably loose.
    assert jnp.allclose(out, ref, atol=5e-2, rtol=5e-2), \
        "mismatch vs pure-JAX reference"

    print("KERNEL_OK")
</pallas_src>

<mosaic_0001>
module attributes {stable_mosaic.version = 11 : i64} {
  func.func @_embed_kernel(%arg0: i32, %arg1: memref<8x8xf32, #tpu.memory_space<vmem>>, %arg2: memref<8x128xf32, #tpu.memory_space<vmem>>, %arg3: memref<1x128xf32, #tpu.memory_space<vmem>>, %arg4: memref<8x128xf32, #tpu.memory_space<vmem>>) attributes {dimension_semantics = [#tpu.dimension_semantics<parallel>], iteration_bounds = array<i64: 2>, scalar_prefetch = 0 : i64, scratch_operands = 0 : i64, tpu.core_type = #tpu.core_type<tc>, window_params = [{transform_indices = @transform_0, window_bounds = array<i64: 8, 8>}, {pipeline_mode = #tpu.pipeline_mode<synchronous>, transform_indices = @transform_1, window_bounds = array<i64: 8, 128>}, {pipeline_mode = #tpu.pipeline_mode<synchronous>, transform_indices = @transform_2, window_bounds = array<i64: 1, 128>}, {transform_indices = @transform_3, window_bounds = array<i64: 8, 128>}]} {
    %c0 = arith.constant 0 : index
    %c0_0 = arith.constant 0 : index
    %0 = vector.load %arg1[%c0, %c0_0] : memref<8x8xf32, #tpu.memory_space<vmem>>, vector<8x8xf32>
    %c0_1 = arith.constant 0 : index
    %c0_2 = arith.constant 0 : index
    %1 = vector.load %arg2[%c0_1, %c0_2] : memref<8x128xf32, #tpu.memory_space<vmem>>, vector<8x128xf32>
    %cst = arith.constant dense<0.000000e+00> : vector<8x128xf32>
    %2 = tpu.matmul %0, %1, %cst {dimension_numbers = #tpu.dot_dimension_numbers<[1], [0], [0], [1], [0, 0, 1, 1], [], []>} : vector<8x8xf32>, vector<8x128xf32>, vector<8x128xf32> -> vector<8x128xf32>
    %c0_3 = arith.constant 0 : index
    %c0_4 = arith.constant 0 : index
    %3 = vector.load %arg3[%c0_3, %c0_4] : memref<1x128xf32, #tpu.memory_space<vmem>>, vector<1x128xf32>
    %4 = vector.broadcast %3 : vector<1x128xf32> to vector<8x128xf32>
    %5 = arith.addf %2, %4 : vector<8x128xf32>
    %c0_5 = arith.constant 0 : index
    %c0_6 = arith.constant 0 : index
    %6 = vector.load %arg4[%c0_5, %c0_6] : memref<8x128xf32, #tpu.memory_space<vmem>>, vector<8x128xf32>
    tpu.vector_store %arg4[%c0_5, %c0_6], %5 {strides = array<i32>} : memref<8x128xf32, #tpu.memory_space<vmem>>, vector<8x128xf32>,
    return
  }
  func.func @transform_0(%arg0: i32) -> (i32, i32) {
    %c0_i32 = arith.constant 0 : i32
    %c0_i32_0 = arith.constant 0 : i32
    return %arg0, %c0_i32 : i32, i32
  }
  func.func @transform_1(%arg0: i32) -> (i32, i32) {
    %c0_i32 = arith.constant 0 : i32
    %c0_i32_0 = arith.constant 0 : i32
    %c0_i32_1 = arith.constant 0 : i32
    return %c0_i32, %c0_i32_0 : i32, i32
  }
  func.func @transform_2(%arg0: i32) -> (i32, i32) {
    %c0_i32 = arith.constant 0 : i32
    %c0_i32_0 = arith.constant 0 : i32
    %c0_i32_1 = arith.constant 0 : i32
    return %c0_i32, %c0_i32_0 : i32, i32
  }
  func.func @transform_3(%arg0: i32) -> (i32, i32) {
    %c0_i32 = arith.constant 0 : i32
    %c0_i32_0 = arith.constant 0 : i32
    return %arg0, %c0_i32 : i32, i32
  }
}

</mosaic_0001>

<llo_original>
// kernel: tpu_custom_call.1
$region0: #{tpu_custom_call.1}
  #allocation0 [shape = 'u32[]', space=smem, size = 0x4, offset = 0x4, fixed_abs, tag = 'smem constant byte address 0x4 - core index']
  #allocation1 [shape = 'u32[144,128]{1,0:T(1,128)}', space=vmem, size = 0x12000, scoped, tag = 'internal scratch']
  %s0 = inlined_call_operand.vmem [shape: f32[16,8], index: 0, kind: input, shape index: {}]
  %s1 = inlined_call_operand.vmem [shape: f32[8,128], index: 1, kind: input, shape index: {}]
  %s2 = inlined_call_operand.vmem [shape: f32[1,128], index: 2, kind: input, shape index: {}]
  %s3 = inlined_call_operand.hbm [shape: f32[16,128], index: 3, kind: output, shape index: {}]
  %s4 = sld [smem:[#allocation0]]
  $region45: #{tpu_custom_call.1} parent=0
    _
  %s6 = ssub.s32 1, %s4
  %s7 = scalar_select 0, %s6, %s4
  $region1: #{tpu_custom_call.1} parent=0
    #allocation2 [shape = 'u8[8192]{0}', space=vmem, size = 0x2000, scoped, tag = 'output window, operand 0']
    #allocation3 [shape = 's32[2]{0}', space=sflag, size = 0x8, scoped, tag = 'scoped memory for tpu_custom_call.1']
    %8 = vsyncpa [#allocation3], 0
    %s9 = scalar_lea.sflag [#allocation3], 1
    %10 = vsyncpa %s9, 0
    loop: start=0, step=1, limit=4
    $region2: #{tpu_custom_call.1} parent=1 // loop_pre_header
      _
    $region3: #{tpu_custom_call.1} parent=1 // loop_header
      %s12 = sphi 0, %s16
      %p13 = scmp.ge.s32.totalorder %s12, 4
      %s22 = sphi 0, %s24
      %s25 = sphi 0, %s22
      %s26 = sphi 0, %s25
      %s42 = sphi 0, %s26
      %s46 = sphi 0, %s46
      %s48 = sphi 0, %s46
      %s49 = sphi 0, %s48
      %s63 = sphi 0, %s49
      %s67 = sphi 0, %s67
      %s69 = sphi 0, %s67
      %s70 = sphi 0, %s69
      %s84 = sphi 0, %s70
      %s90 = sphi 0, %s92
      %s93 = sphi 0, %s90
      %s94 = sphi 0, %s93
      %s110 = sphi 0, %s94
    $region4: #{tpu_custom_call.1} parent=1 // loop_header_branch
      %15 = sbr.rel (%p13) target = $region8
    $region5: #{tpu_custom_call.1} parent=1 // loop_body
      %s17 = ssub.s32 %s12, 1
      %s18 = ssub.s32 %s12, 2
      %s19 = sadd.s32 %s12, 1
      %s20 = ssub.s32 %s12, %s19
      %p21 = scmp.eq.s32.totalorder %s20, 0
      %s23 = sadd.s32 %s22, 1
      %s24 = scalar_select %p21, %s22, %s23
      %p27 = pneg %p21
      %p28 = scmp.eq.s32.totalorder %s12, 1
      %p29 = por %p27, %p28
      %p30 = scmp.ne.s32.totalorder %s22, %s25
      %p31 = scmp.eq.s32.totalorder %s12, 0
      %p32 = por %p30, %p31
      %p33 = scmp.ne.s32.totalorder %s22, %s25
      %p34 = scmp.eq.s32.totalorder %s17, 1
      %p35 = por %p33, %p34
      %p36 = scmp.ne.s32.totalorder %s25, %s26
      %p37 = scmp.eq.s32.totalorder %s17, 0
      %p38 = por %p36, %p37
      %p39 = scmp.ne.s32.totalorder %s25, %s26
      %p40 = scmp.eq.s32.totalorder %s18, 1
      %p41 = por %p39, %p40
      %p43 = scmp.ne.s32.totalorder %s26, %s42
      %p44 = scmp.eq.s32.totalorder %s18, 0
      %p45 = por %p43, %p44
      %s47 = sadd.s32 %s46, 1
      %p50 = scmp.eq.s32.totalorder %s12, 1
      %p51 = scmp.ne.s32.totalorder %s46, %s48
      %p52 = scmp.eq.s32.totalorder %s12, 0
      %p53 = por %p51, %p52
      %p54 = scmp.ne.s32.totalorder %s46, %s48
      %p55 = scmp.eq.s32.totalorder %s17, 1
      %p56 = por %p54, %p55
      %p57 = scmp.ne.s32.totalorder %s48, %s49
      %p58 = scmp.eq.s32.totalorder %s17, 0
      %p59 = por %p57, %p58
      %p60 = scmp.ne.s32.totalorder %s48, %s49
      %p61 = scmp.eq.s32.totalorder %s18, 1
      %p62 = por %p60, %p61
      %p64 = scmp.ne.s32.totalorder %s49, %s63
      %p65 = scmp.eq.s32.totalorder %s18, 0
      %p66 = por %p64, %p65
      %s68 = sadd.s32 %s67, 1
      %p71 = scmp.eq.s32.totalorder %s12, 1
      %p72 = scmp.ne.s32.totalorder %s67, %s69
      %p73 = scmp.eq.s32.totalorder %s12, 0
      %p74 = por %p72, %p73
      %p75 = scmp.ne.s32.totalorder %s67, %s69
      %p76 = scmp.eq.s32.totalorder %s17, 1
      %p77 = por %p75, %p76
      %p78 = scmp.ne.s32.totalorder %s69, %s70
      %p79 = scmp.eq.s32.totalorder %s17, 0
      %p80 = por %p78, %p79
      %p81 = scmp.ne.s32.totalorder %s69, %s70
      %p82 = scmp.eq.s32.totalorder %s18, 1
      %p83 = por %p81, %p82
      %p85 = scmp.ne.s32.totalorder %s70, %s84
      %p86 = scmp.eq.s32.totalorder %s18, 0
      %p87 = por %p85, %p86
      %s88 = ssub.s32 %s12, %s19
      %p89 = scmp.eq.s32.totalorder %s88, 0
      %s91 = sadd.s32 %s90, 1
      %s92 = scalar_select %p89, %s90, %s91
      %p95 = pneg %p89
      %p96 = scmp.eq.s32.totalorder %s12, 1
      %p97 = por %p95, %p96
      %p98 = scmp.ne.s32.totalorder %s90, %s93
      %p99 = scmp.eq.s32.totalorder %s12, 0
      %p100 = por %p98, %p99
      %p101 = scmp.ne.s32.totalorder %s90, %s93
      %p102 = scmp.eq.s32.totalorder %s17, 1
      %p103 = por %p101, %p102
      %p104 = scmp.ne.s32.totalorder %s93, %s94
      %p105 = scmp.eq.s32.totalorder %s17, 0
      %p106 = por %p104, %p105
      %p107 = scmp.ne.s32.totalorder %s93, %s94
      %p108 = scmp.eq.s32.totalorder %s18, 1
      %p109 = por %p107, %p108
      %p111 = scmp.ne.s32.totalorder %s94, %s110
      %p112 = scmp.eq.s32.totalorder %s18, 0
      %p113 = por %p111, %p112
      %p114 = scmp.le.s32.totalorder 1, %s12
      %p115 = scmp.lt.s32.totalorder %s12, 3
      %p116 = pnand %p114, %p115
      %p117 = pneg %p116
      // Predicated region
      $region9: #{tpu_custom_call.1} parent=5 // pred_check
        _
      $region10: #{tpu_custom_call.1} parent=5 // pred_check_branch
        %119 = sbr.rel (%p116) target = $region12
      $region11: #{tpu_custom_call.1} parent=5 // pred_region
        %s120 = ssub.s32 %s12, 1
        // Predicated region
        $region13: #{tpu_custom_call.1} parent=11 // pred_check
          %p121 = pneg %p59
        $region14: #{tpu_custom_call.1} parent=11 // pred_check_branch
          %123 = sbr.rel (%p121) target = $region16
        $region15: #{tpu_custom_call.1} parent=11 // pred_region
          _
        $region16: #{tpu_custom_call.1} parent=11 // pred_fallthru
          _
        // Predicated region
        $region17: #{tpu_custom_call.1} parent=11 // pred_check
          %p124 = pneg %p80
        $region18: #{tpu_custom_call.1} parent=11 // pred_check_branch
          %126 = sbr.rel (%p124) target = $region20
        $region19: #{tpu_custom_call.1} parent=11 // pred_region
          _
        $region20: #{tpu_custom_call.1} parent=11 // pred_fallthru
          _
      $region12: #{tpu_custom_call.1} parent=5 // pred_fallthru
        _
      %p127 = scmp.lt.s32.totalorder %s12, 2
      // Predicated region
      $region21: #{tpu_custom_call.1} parent=5 // pred_check
        %p128 = pneg %p127
      $region22: #{tpu_custom_call.1} parent=5 // pred_check_branch
        %130 = sbr.rel (%p128) target = $region24
      $region23: #{tpu_custom_call.1} parent=5 // pred_region
        // Predicated region
        $region25: #{tpu_custom_call.1} parent=23 // pred_check
          %p131 = pneg %p32
        $region26: #{tpu_custom_call.1} parent=23 // pred_check_branch
          %133 = sbr.rel (%p131) target = $region28
        $region27: #{tpu_custom_call.1} parent=23 // pred_region
          %p134 = scmp.lt.s32.totalorder %s12, 1
          %s135 = scalar_select %p134, %s12, 1
          %s136 = smul.addr %s135, 8
          %s137 = scalar_lea.vmem %s0, %s136
        $region28: #{tpu_custom_call.1} parent=23 // pred_fallthru
          _
      $region24: #{tpu_custom_call.1} parent=5 // pred_fallthru
        _
      %p138 = scmp.le.s32.totalorder 1, %s12
      %p139 = scmp.lt.s32.totalorder %s12, 3
      %p140 = pnand %p138, %p139
      %p141 = pneg %p140
      // Predicated region
      $region29: #{tpu_custom_call.1} parent=5 // pred_check
        _
      $region30: #{tpu_custom_call.1} parent=5 // pred_check_branch
        %143 = sbr.rel (%p140) target = $region32
      $region31: #{tpu_custom_call.1} parent=5 // pred_region
        %s144 = ssub.s32 %s12, 1
        %p145 = scmp.lt.s32.totalorder %s17, 1
        %s146 = scalar_select %p145, %s17, 1
        %s147 = smul.addr %s146, 8
        %s148 = scalar_lea.vmem %s0, %s147
        %p149 = pneg %p38
        %p150 = pneg %p35
        %p151 = pneg %p59
        %p152 = pneg %p56
        %p153 = pneg %p80
        %p154 = pneg %p77
        %p155 = pneg %p106
        %p156 = pneg %p103
        %s157 = sand.u32 %s93, 1
        %s158 = scalar_lea.sflag [#allocation3], %s157
        %s159 = sand.u32 %s93, 1
        %s160 = smul.addr %s159, 8
        %s161 = scalar_lea.vmem [#allocation2], %s160
        %p162 = scmp.lt.s32.totalorder %s17, 1
        %s163 = scalar_select %p162, %s17, 1
        %s164 = smul.addr %s163, 8
        %s165 = scalar_lea.vmem %s0, %s164
        %v166 = vld [vmem:[%s165] sm:$0xff]
        %v167 = vld [vmem:[%s1] sm:$0xff]
        %v168 = vld [vmem:[%s2] sm:$0x1]
        %v170 = vlaneseq
        %v171 = vshrl.u32 %v170, 7
        %v172 = vsub.s32 0, %v171
        %v173 = vrot.slane %v168, %v172
        %vm175 = vcmask 64512
        %v177 = vsel %vm175, %v166, 0
        %179 = vmatprep.subr.mxu0 0.0
        %180 = vmatpush1.msra.mxu0 %v167
        %181 = vmatprep.subr.mxu0 0.0
        %182 = vmatpush1.msra.mxu0 0.0
        %183 = vmatprep.subr.mxu0 0.0
        %184 = vmatpush1.msra.mxu0 0.0
        %185 = vmatprep.subr.mxu0 0.0
        %186 = vmatpush1.msra.mxu0 0.0
        %187 = vmatprep.subr.mxu0 0.0
        %188 = vmatpush1.msra.mxu0 0.0
        %189 = vmatprep.subr.mxu0 0.0
        %190 = vmatpush1.msra.mxu0 0.0
        %191 = vmatprep.subr.mxu0 0.0
        %192 = vmatpush1.msra.mxu0 0.0
        %193 = vmatprep.subr.mxu0 0.0
        %194 = vmatpush1.msra.mxu0 0.0
        %195 = vmatprep.subr.mxu0 0.0
        %196 = vmatpush1.msra.mxu0 0.0
        %197 = vmatprep.subr.mxu0 0.0
        %198 = vmatpush1.msra.mxu0 0.0
        %199 = vmatprep.subr.mxu0 0.0
        %200 = vmatpush1.msra.mxu0 0.0
        %201 = vmatprep.subr.mxu0 0.0
        %202 = vmatpush1.msra.mxu0 0.0
        %203 = vmatprep.subr.mxu0 0.0
        %204 = vmatpush1.msra.mxu0 0.0
        %205 = vmatprep.subr.mxu0 0.0
        %206 = vmatpush1.msra.mxu0 0.0
        %207 = vmatprep.subr.mxu0 0.0
        %208 = vmatpush1.msra.mxu0 0.0
        %209 = vmatprep.subr.mxu0 0.0
        %210 = vmatpush1.msra.mxu0 0.0
        %211 = vmatprep.subr.mxu0 0.0
        %212 = vmatpush1.msra.mxu0 0.0
        %213 = vmatprep.subr.mxu0 0.0
        %214 = vmatpush1.msra.mxu0 0.0
        %215 = vmatprep.subr.mxu0 0.0
        %216 = vmatpush1.msra.mxu0 0.0
        %217 = vmatprep.subr.mxu0 0.0
        %218 = vmatpush1.msra.mxu0 0.0
        %219 = vmatprep.subr.mxu0 0.0
        %220 = vmatpush1.msra.mxu0 0.0
        %221 = vmatprep.subr.mxu0 0.0
        %222 = vmatpush1.msra.mxu0 0.0
        %223 = vmatprep.subr.mxu0 0.0
        %224 = vmatpush1.msra.mxu0 0.0
        %225 = vmatprep.subr.mxu0 0.0
        %226 = vmatpush1.msra.mxu0 0.0
        %227 = vmatprep.subr.mxu0 0.0
        %228 = vmatpush1.msra.mxu0 0.0
        %229 = vmatprep.subr.mxu0 0.0
        %230 = vmatpush1.msra.mxu0 0.0
        %231 = vmatprep.subr.mxu0 0.0
        %232 = vmatpush1.msra.mxu0 0.0
        %233 = vmatprep.subr.mxu0 0.0
        %234 = vmatpush1.msra.mxu0 0.0
        %235 = vmatprep.subr.mxu0 0.0
        %236 = vmatpush1.msra.mxu0 0.0
        %237 = vmatprep.subr.mxu0 0.0
        %238 = vmatpush1.msra.mxu0 0.0
        %239 = vmatprep.subr.mxu0 0.0
        %240 = vmatpush1.msra.mxu0 0.0
        %241 = vmatprep.subr.mxu0 0.0
        %242 = vmatpush1.msra.mxu0 0.0
        %243 = vmatprep.mubr.f32.mxu0 0.0
        %244 = vmatmul.mubr.f32.gmra.mrb[0].mxu0 %v177
        %v245 = vpop.f32.mrb[0].mxu0
        %v246 = vadd.f32 %v173, %v245
        %v247 = vpop.f32.mrb[0].mxu0
        %248 = vdwg.mxu0
        %249 = vst [vmem:[%s161] sm:$0xff] %v246
        %s250 = sand.u32 %s93, 1
        %s251 = scalar_lea.sflag [#allocation3], %s250
        %s252 = sand.u32 %s93, 1
        %s253 = smul.addr %s252, 8
        %s254 = scalar_lea.vmem [#allocation2], %s253
        // Predicated region
        $region33: #{tpu_custom_call.1} parent=31 // pred_check
          %p255 = pneg %p103
        $region34: #{tpu_custom_call.1} parent=31 // pred_check_branch
          %257 = sbr.rel (%p255) target = $region36
        $region35: #{tpu_custom_call.1} parent=31 // pred_region
          %s259 = ssub.s32 128, 128
          %260 = vsyncadd %s251, %s259
          %s261 = smul.addr %s17, 128
          %s262 = scalar_lea.hbm %s3, %s261
          %s264 = sshll.u32 %s254, 4
          %s265 = int_to_ptr.vmem [resolvable:$true] %s264
          %267 = dma.vmem_to_hbm [thread:$0]  %s265, 128, %s262, %s251
        $region36: #{tpu_custom_call.1} parent=31 // pred_fallthru
          _
      $region32: #{tpu_custom_call.1} parent=5 // pred_fallthru
        _
      %p268 = scmp.le.s32.totalorder 2, %s12
      // Predicated region
      $region37: #{tpu_custom_call.1} parent=5 // pred_check
        %p269 = pneg %p268
      $region38: #{tpu_custom_call.1} parent=5 // pred_check_branch
        %271 = sbr.rel (%p269) target = $region40
      $region39: #{tpu_custom_call.1} parent=5 // pred_region
        %s272 = ssub.s32 %s12, 2
        // Predicated region
        $region41: #{tpu_custom_call.1} parent=39 // pred_check
          %p273 = pneg %p109
        $region42: #{tpu_custom_call.1} parent=39 // pred_check_branch
          %275 = sbr.rel (%p273) target = $region44
        $region43: #{tpu_custom_call.1} parent=39 // pred_region
          %s276 = sand.u32 %s94, 1
          %s277 = scalar_lea.sflag [#allocation3], %s276
          %s278 = sand.u32 %s94, 1
          %s279 = smul.addr %s278, 8
          %s280 = scalar_lea.vmem [#allocation2], %s279
          %281 = dma.done %s277, 128
        $region44: #{tpu_custom_call.1} parent=39 // pred_fallthru
          _
      $region40: #{tpu_custom_call.1} parent=5 // pred_fallthru
        _
    $region6: #{tpu_custom_call.1} parent=1 // loop_footer
      %s16 = sadd.s32 1, %s12
    $region7: #{tpu_custom_call.1} parent=1 // loop_footer_branch
      %11 = sbr.rel target = $region3
    $region8: #{tpu_custom_call.1} parent=1 // loop_exit
      _
    %282 = vsyncpa [#allocation3], 1
    %s283 = scalar_lea.sflag [#allocation3], 1
    %284 = vsyncpa %s283, 1

</llo_original>
